<compile_context>
chip_gen: v6e
topology: v6e:2x2x1
jax: 0.10.0
libtpu: 0.0.40
codegen_flags: <defaults>
</compile_context>

<pallas_src>
import math

import jax
import jax.numpy as jnp
import numpy as np
from jax.experimental import pallas as pl
from jax.experimental.pallas import tpu as pltpu


def _round_up(x, m):
    return (x + m - 1) // m * m


def _affine_cond_kernel(cond_ref, x_ref, w1_ref, b1_ref,
                        w2m_ref, b2m_ref, w2b_ref, b2b_ref, o_ref):
    # cond_ref: (TR, cond_dim)        x_ref:   (TR, channels)
    # w1_ref:   (cond_dim, cond_dim)  b1_ref:  (1, cond_dim)
    # w2m_ref:  (cond_dim, channels)  b2m_ref: (1, channels)
    # w2b_ref:  (cond_dim, channels)  b2b_ref: (1, channels)
    # o_ref:    (TR, channels)
    h = jnp.dot(cond_ref[...], w1_ref[...], preferred_element_type=jnp.float32)
    h = h + b1_ref[...].astype(jnp.float32)
    h = h * (1.0 / (1.0 + jnp.exp(-h)))            # SiLU; exp/div go to the EUP
    h = h.astype(w2m_ref.dtype)
    m = jnp.dot(h, w2m_ref[...], preferred_element_type=jnp.float32)
    m = m + b2m_ref[...].astype(jnp.float32)
    b = jnp.dot(h, w2b_ref[...], preferred_element_type=jnp.float32)
    b = b + b2b_ref[...].astype(jnp.float32)
    o_ref[...] = (m * x_ref[...].astype(jnp.float32) + b).astype(o_ref.dtype)


def affine_conditional_forward(x, cond, w1, b1, w2, b2, *, row_tile=512):
    """AffineConditional.forward.

    x:    (..., channels)
    cond: (..., cond_dim)   (leading dims broadcastable to x's leading dims)
    w1:   (cond_dim, cond_dim),   b1: (cond_dim,)       -- first Linear
    w2:   (2*channels, cond_dim), b2: (2*channels,)     -- second Linear
    returns: (..., channels) = m * x + b with (m, b) = split(mlp(cond))
    """
    channels = x.shape[-1]
    cond_dim = cond.shape[-1]
    assert w1.shape == (cond_dim, cond_dim)
    assert w2.shape == (2 * channels, cond_dim)

    lead = x.shape[:-1]
    cond = jnp.broadcast_to(cond, lead + (cond_dim,))
    R = int(np.prod(lead)) if lead else 1
    x2 = x.reshape(R, channels)
    c2 = cond.reshape(R, cond_dim)

    # PyTorch Linear computes y = x @ W.T + b  ->  pass W.T to the kernel.
    w1_t = jnp.transpose(w1)                     # (cond_dim, cond_dim)
    w2_t = jnp.transpose(w2)                     # (cond_dim, 2*channels)
    w2m = w2_t[:, :channels]                     # "m" half
    w2b = w2_t[:, channels:]                     # "b" half
    b1r = b1.reshape(1, cond_dim)
    b2m = b2[:channels].reshape(1, channels)
    b2b = b2[channels:].reshape(1, channels)

    # Row tiling: sublane-aligned tile, rows padded up to a tile multiple.
    tr = min(int(row_tile), _round_up(R, 8))
    r_pad = _round_up(R, tr)
    if r_pad != R:
        x2 = jnp.pad(x2, ((0, r_pad - R), (0, 0)))
        c2 = jnp.pad(c2, ((0, r_pad - R), (0, 0)))

    grid = (r_pad // tr,)
    out = pl.pallas_call(
        _affine_cond_kernel,
        out_shape=jax.ShapeDtypeStruct((r_pad, channels), x.dtype),
        grid_spec=pltpu.PrefetchScalarGridSpec(
            num_scalar_prefetch=0,
            grid=grid,
            in_specs=[
                pl.BlockSpec((tr, cond_dim), lambda i: (i, 0)),        # cond rows
                pl.BlockSpec((tr, channels), lambda i: (i, 0)),        # x rows
                pl.BlockSpec((cond_dim, cond_dim), lambda i: (0, 0)),  # W1^T (resident)
                pl.BlockSpec((1, cond_dim), lambda i: (0, 0)),         # b1
                pl.BlockSpec((cond_dim, channels), lambda i: (0, 0)),  # W2m (resident)
                pl.BlockSpec((1, channels), lambda i: (0, 0)),         # b2m
                pl.BlockSpec((cond_dim, channels), lambda i: (0, 0)),  # W2b (resident)
                pl.BlockSpec((1, channels), lambda i: (0, 0)),         # b2b
            ],
            out_specs=pl.BlockSpec((tr, channels), lambda i: (i, 0)),
        ),
        compiler_params=pltpu.CompilerParams(
            dimension_semantics=("parallel",)),
    )(c2, x2, w1_t, b1r, w2m, b2m, w2b, b2b)

    out = out[:R]
    return out.reshape(lead + (channels,))


if __name__ == "__main__":
    key = jax.random.PRNGKey(0)
    kx, kc, kw1, kb1, kw2, kb2 = jax.random.split(key, 6)

    # Small shapes consistent with the module: batch=2, seq=8,
    # channels=32, cond_dim=32.
    batch, seq, channels, cond_dim = 2, 8, 32, 32

    x = jax.random.normal(kx, (batch, seq, channels), dtype=jnp.float32)
    cond = jax.random.normal(kc, (batch, seq, cond_dim), dtype=jnp.float32)

    # Deterministic parameter init (PyTorch nn.Linear-style uniform bounds).
    bound = 1.0 / math.sqrt(cond_dim)
    w1 = jax.random.uniform(kw1, (cond_dim, cond_dim),
                            minval=-bound, maxval=bound, dtype=jnp.float32)
    b1 = jax.random.uniform(kb1, (cond_dim,),
                            minval=-bound, maxval=bound, dtype=jnp.float32)
    w2 = jax.random.uniform(kw2, (2 * channels, cond_dim),
                            minval=-bound, maxval=bound, dtype=jnp.float32)
    b2 = jax.random.uniform(kb2, (2 * channels,),
                            minval=-bound, maxval=bound, dtype=jnp.float32)

    out = affine_conditional_forward(x, cond, w1, b1, w2, b2)
    out = jax.block_until_ready(out)
    assert out.shape == (batch, seq, channels)

    # Pure-JAX reference of the PyTorch forward.
    h = cond @ w1.T + b1
    h = h * jax.nn.sigmoid(h)                       # SiLU
    mb = h @ w2.T + b2
    m_ref, b_ref = mb[..., :channels], mb[..., channels:]
    ref = m_ref * x + b_ref
    np.testing.assert_allclose(np.asarray(out), np.asarray(ref),
                               rtol=1e-5, atol=1e-5)

    print("KERNEL_OK")
</pallas_src>

<mosaic_0001>
module attributes {stable_mosaic.version = 11 : i64} {
  func.func @_affine_cond_kernel(%arg0: i32, %arg1: memref<16x32xf32, #tpu.memory_space<vmem>>, %arg2: memref<16x32xf32, #tpu.memory_space<vmem>>, %arg3: memref<32x32xf32, #tpu.memory_space<vmem>>, %arg4: memref<1x32xf32, #tpu.memory_space<vmem>>, %arg5: memref<32x32xf32, #tpu.memory_space<vmem>>, %arg6: memref<1x32xf32, #tpu.memory_space<vmem>>, %arg7: memref<32x32xf32, #tpu.memory_space<vmem>>, %arg8: memref<1x32xf32, #tpu.memory_space<vmem>>, %arg9: memref<16x32xf32, #tpu.memory_space<vmem>>) attributes {dimension_semantics = [#tpu.dimension_semantics<parallel>], iteration_bounds = array<i64: 1>, scalar_prefetch = 0 : i64, scratch_operands = 0 : i64, tpu.core_type = #tpu.core_type<tc>, window_params = [{transform_indices = @transform_0, window_bounds = array<i64: 16, 32>}, {transform_indices = @transform_1, window_bounds = array<i64: 16, 32>}, {pipeline_mode = #tpu.pipeline_mode<synchronous>, transform_indices = @transform_2, window_bounds = array<i64: 32, 32>}, {pipeline_mode = #tpu.pipeline_mode<synchronous>, transform_indices = @transform_3, window_bounds = array<i64: 1, 32>}, {pipeline_mode = #tpu.pipeline_mode<synchronous>, transform_indices = @transform_4, window_bounds = array<i64: 32, 32>}, {pipeline_mode = #tpu.pipeline_mode<synchronous>, transform_indices = @transform_5, window_bounds = array<i64: 1, 32>}, {pipeline_mode = #tpu.pipeline_mode<synchronous>, transform_indices = @transform_6, window_bounds = array<i64: 32, 32>}, {pipeline_mode = #tpu.pipeline_mode<synchronous>, transform_indices = @transform_7, window_bounds = array<i64: 1, 32>}, {transform_indices = @transform_8, window_bounds = array<i64: 16, 32>}]} {
    %c0 = arith.constant 0 : index
    %c0_0 = arith.constant 0 : index
    %0 = vector.load %arg1[%c0, %c0_0] : memref<16x32xf32, #tpu.memory_space<vmem>>, vector<16x32xf32>
    %c0_1 = arith.constant 0 : index
    %c0_2 = arith.constant 0 : index
    %1 = vector.load %arg3[%c0_1, %c0_2] : memref<32x32xf32, #tpu.memory_space<vmem>>, vector<32x32xf32>
    %cst = arith.constant dense<0.000000e+00> : vector<16x32xf32>
    %2 = tpu.matmul %0, %1, %cst {dimension_numbers = #tpu.dot_dimension_numbers<[1], [0], [0], [1], [0, 0, 1, 1], [], []>} : vector<16x32xf32>, vector<32x32xf32>, vector<16x32xf32> -> vector<16x32xf32>
    %c0_3 = arith.constant 0 : index
    %c0_4 = arith.constant 0 : index
    %3 = vector.load %arg4[%c0_3, %c0_4] : memref<1x32xf32, #tpu.memory_space<vmem>>, vector<1x32xf32>
    %4 = vector.broadcast %3 : vector<1x32xf32> to vector<16x32xf32>
    %5 = arith.addf %2, %4 : vector<16x32xf32>
    %cst_5 = arith.constant 0.000000e+00 : f32
    %6 = vector.broadcast %cst_5 : f32 to vector<16x32xf32>
    %7 = arith.subf %6, %5 : vector<16x32xf32>
    %8 = math.exp %7 : vector<16x32xf32>
    %cst_6 = arith.constant 1.000000e+00 : f32
    %9 = vector.broadcast %cst_6 : f32 to vector<16x32xf32>
    %10 = arith.addf %9, %8 : vector<16x32xf32>
    %cst_7 = arith.constant 1.000000e+00 : f32
    %11 = vector.broadcast %cst_7 : f32 to vector<16x32xf32>
    %12 = arith.divf %11, %10 : vector<16x32xf32>
    %13 = arith.mulf %5, %12 : vector<16x32xf32>
    %c0_8 = arith.constant 0 : index
    %c0_9 = arith.constant 0 : index
    %14 = vector.load %arg5[%c0_8, %c0_9] : memref<32x32xf32, #tpu.memory_space<vmem>>, vector<32x32xf32>
    %cst_10 = arith.constant dense<0.000000e+00> : vector<16x32xf32>
    %15 = tpu.matmul %13, %14, %cst_10 {dimension_numbers = #tpu.dot_dimension_numbers<[1], [0], [0], [1], [0, 0, 1, 1], [], []>} : vector<16x32xf32>, vector<32x32xf32>, vector<16x32xf32> -> vector<16x32xf32>
    %c0_11 = arith.constant 0 : index
    %c0_12 = arith.constant 0 : index
    %16 = vector.load %arg6[%c0_11, %c0_12] : memref<1x32xf32, #tpu.memory_space<vmem>>, vector<1x32xf32>
    %17 = vector.broadcast %16 : vector<1x32xf32> to vector<16x32xf32>
    %18 = arith.addf %15, %17 : vector<16x32xf32>
    %c0_13 = arith.constant 0 : index
    %c0_14 = arith.constant 0 : index
    %19 = vector.load %arg7[%c0_13, %c0_14] : memref<32x32xf32, #tpu.memory_space<vmem>>, vector<32x32xf32>
    %cst_15 = arith.constant dense<0.000000e+00> : vector<16x32xf32>
    %20 = tpu.matmul %13, %19, %cst_15 {dimension_numbers = #tpu.dot_dimension_numbers<[1], [0], [0], [1], [0, 0, 1, 1], [], []>} : vector<16x32xf32>, vector<32x32xf32>, vector<16x32xf32> -> vector<16x32xf32>
    %c0_16 = arith.constant 0 : index
    %c0_17 = arith.constant 0 : index
    %21 = vector.load %arg8[%c0_16, %c0_17] : memref<1x32xf32, #tpu.memory_space<vmem>>, vector<1x32xf32>
    %22 = vector.broadcast %21 : vector<1x32xf32> to vector<16x32xf32>
    %23 = arith.addf %20, %22 : vector<16x32xf32>
    %c0_18 = arith.constant 0 : index
    %c0_19 = arith.constant 0 : index
    %24 = vector.load %arg2[%c0_18, %c0_19] : memref<16x32xf32, #tpu.memory_space<vmem>>, vector<16x32xf32>
    %25 = arith.mulf %18, %24 : vector<16x32xf32>
    %26 = arith.addf %25, %23 : vector<16x32xf32>
    %c0_20 = arith.constant 0 : index
    %c0_21 = arith.constant 0 : index
    %27 = vector.load %arg9[%c0_20, %c0_21] : memref<16x32xf32, #tpu.memory_space<vmem>>, vector<16x32xf32>
    tpu.vector_store %arg9[%c0_20, %c0_21], %26 {strides = array<i32>} : memref<16x32xf32, #tpu.memory_space<vmem>>, vector<16x32xf32>,
    return
  }
  func.func @transform_0(%arg0: i32) -> (i32, i32) {
    %c0_i32 = arith.constant 0 : i32
    %c0_i32_0 = arith.constant 0 : i32
    return %arg0, %c0_i32 : i32, i32
  }
  func.func @transform_1(%arg0: i32) -> (i32, i32) {
    %c0_i32 = arith.constant 0 : i32
    %c0_i32_0 = arith.constant 0 : i32
    return %arg0, %c0_i32 : i32, i32
  }
  func.func @transform_2(%arg0: i32) -> (i32, i32) {
    %c0_i32 = arith.constant 0 : i32
    %c0_i32_0 = arith.constant 0 : i32
    %c0_i32_1 = arith.constant 0 : i32
    return %c0_i32, %c0_i32_0 : i32, i32
  }
  func.func @transform_3(%arg0: i32) -> (i32, i32) {
    %c0_i32 = arith.constant 0 : i32
    %c0_i32_0 = arith.constant 0 : i32
    %c0_i32_1 = arith.constant 0 : i32
    return %c0_i32, %c0_i32_0 : i32, i32
  }
  func.func @transform_4(%arg0: i32) -> (i32, i32) {
    %c0_i32 = arith.constant 0 : i32
    %c0_i32_0 = arith.constant 0 : i32
    %c0_i32_1 = arith.constant 0 : i32
    return %c0_i32, %c0_i32_0 : i32, i32
  }
  func.func @transform_5(%arg0: i32) -> (i32, i32) {
    %c0_i32 = arith.constant 0 : i32
    %c0_i32_0 = arith.constant 0 : i32
    %c0_i32_1 = arith.constant 0 : i32
    return %c0_i32, %c0_i32_0 : i32, i32
  }
  func.func @transform_6(%arg0: i32) -> (i32, i32) {
    %c0_i32 = arith.constant 0 : i32
    %c0_i32_0 = arith.constant 0 : i32
    %c0_i32_1 = arith.constant 0 : i32
    return %c0_i32, %c0_i32_0 : i32, i32
  }
  func.func @transform_7(%arg0: i32) -> (i32, i32) {
    %c0_i32 = arith.constant 0 : i32
    %c0_i32_0 = arith.constant 0 : i32
    %c0_i32_1 = arith.constant 0 : i32
    return %c0_i32, %c0_i32_0 : i32, i32
  }
  func.func @transform_8(%arg0: i32) -> (i32, i32) {
    %c0_i32 = arith.constant 0 : i32
    %c0_i32_0 = arith.constant 0 : i32
    return %arg0, %c0_i32 : i32, i32
  }
}

</mosaic_0001>

<llo_original>
// kernel: tpu_custom_call.1
$region0: #{tpu_custom_call.1}
  #allocation0 [shape = 'u32[]', space=smem, size = 0x4, offset = 0x4, fixed_abs, tag = 'smem constant byte address 0x4 - core index']
  #allocation1 [shape = 'u32[144,128]{1,0:T(1,128)}', space=vmem, size = 0x12000, scoped, tag = 'internal scratch']
  %s0 = inlined_call_operand.hbm [shape: f32[16,32], index: 0, kind: input, shape index: {}]
  %s1 = inlined_call_operand.hbm [shape: f32[16,32], index: 1, kind: input, shape index: {}]
  %s2 = inlined_call_operand.hbm [shape: f32[32,32], index: 2, kind: input, shape index: {}]
  %s3 = inlined_call_operand.vmem [shape: f32[1,32], index: 3, kind: input, shape index: {}]
  %s4 = inlined_call_operand.hbm [shape: f32[32,32], index: 4, kind: input, shape index: {}]
  %s5 = inlined_call_operand.vmem [shape: f32[1,32], index: 5, kind: input, shape index: {}]
  %s6 = inlined_call_operand.hbm [shape: f32[32,32], index: 6, kind: input, shape index: {}]
  %s7 = inlined_call_operand.vmem [shape: f32[1,32], index: 7, kind: input, shape index: {}]
  %s8 = inlined_call_operand.hbm [shape: f32[16,32], index: 8, kind: output, shape index: {}]
  %s9 = sld [smem:[#allocation0]]
  $region62: #{tpu_custom_call.1} parent=0
    _
  %s11 = ssub.s32 1, %s9
  %s12 = scalar_select 0, %s11, %s9
  $region1: #{tpu_custom_call.1} parent=0
    #allocation2 [shape = 'u8[8192]{0}', space=vmem, size = 0x2000, scoped, tag = 'input window, operand 0, single buffered']
    #allocation3 [shape = 's32[1]{0}', space=sflag, size = 0x4, scoped, tag = 'scoped memory for tpu_custom_call.1']
    #allocation4 [shape = 's32[1]{0}', space=sflag, size = 0x4, scoped, tag = 'scoped memory for tpu_custom_call.1']
    #allocation5 [shape = 'u8[8192]{0}', space=vmem, size = 0x2000, scoped, tag = 'input window, operand 1, single buffered']
    #allocation6 [shape = 's32[1]{0}', space=sflag, size = 0x4, scoped, tag = 'scoped memory for tpu_custom_call.1']
    #allocation7 [shape = 'u8[16384]{0}', space=vmem, size = 0x4000, scoped, tag = 'input window, operand 2, single buffered']
    #allocation8 [shape = 'u8[16384]{0}', space=vmem, size = 0x4000, scoped, tag = 'input window, operand 4, single buffered']
    #allocation9 [shape = 's32[1]{0}', space=sflag, size = 0x4, scoped, tag = 'scoped memory for tpu_custom_call.1']
    #allocation10 [shape = 'u8[16384]{0}', space=vmem, size = 0x4000, scoped, tag = 'input window, operand 6, single buffered']
    #allocation11 [shape = 'u8[8192]{0}', space=vmem, size = 0x2000, scoped, tag = 'output window, operand 0, single buffered']
    %13 = vsyncpa [#allocation3], 0
    %14 = vsyncpa [#allocation6], 0
    %15 = vsyncpa [#allocation9], 0
    %16 = vsyncpa [#allocation4], 0
    // Predicated region
    $region2: #{tpu_custom_call.1} parent=1 // pred_check
      _
    $region3: #{tpu_custom_call.1} parent=1 // pred_check_branch
      %18 = sbr.rel (0) target = $region5
    $region4: #{tpu_custom_call.1} parent=1 // pred_region
      %s20 = ssub.s32 256, 256
      %21 = vsyncadd [#allocation3], %s20
      %s22 = sshll.u32 [#allocation2], 4
      %s23 = int_to_ptr.vmem [resolvable:$true] %s22
      %28 = dma.hbm_to_vmem [thread:$0]  %s0, 256, %s23, [#allocation3], 128, 128, 8
    $region5: #{tpu_custom_call.1} parent=1 // pred_fallthru
      _
    // Predicated region
    $region6: #{tpu_custom_call.1} parent=1 // pred_check
      _
    $region7: #{tpu_custom_call.1} parent=1 // pred_check_branch
      %30 = sbr.rel (0) target = $region9
    $region8: #{tpu_custom_call.1} parent=1 // pred_region
      %s32 = ssub.s32 256, 256
      %33 = vsyncadd [#allocation6], %s32
      %s34 = sshll.u32 [#allocation5], 4
      %s35 = int_to_ptr.vmem [resolvable:$true] %s34
      %40 = dma.hbm_to_vmem [thread:$0]  %s1, 256, %s35, [#allocation6], 128, 128, 8
    $region9: #{tpu_custom_call.1} parent=1 // pred_fallthru
      _
    // Predicated region
    $region10: #{tpu_custom_call.1} parent=1 // pred_check
      _
    $region11: #{tpu_custom_call.1} parent=1 // pred_check_branch
      %42 = sbr.rel (0) target = $region13
    $region12: #{tpu_custom_call.1} parent=1 // pred_region
      %s44 = ssub.s32 512, 512
      %45 = vsyncadd [#allocation6], %s44
      %s46 = sshll.u32 [#allocation7], 4
      %s47 = int_to_ptr.vmem [resolvable:$true] %s46
      %52 = dma.hbm_to_vmem [thread:$0]  %s2, 512, %s47, [#allocation6], 128, 128, 8
    $region13: #{tpu_custom_call.1} parent=1 // pred_fallthru
      _
    // Predicated region
    $region14: #{tpu_custom_call.1} parent=1 // pred_check
      _
    $region15: #{tpu_custom_call.1} parent=1 // pred_check_branch
      %54 = sbr.rel (0) target = $region17
    $region16: #{tpu_custom_call.1} parent=1 // pred_region
      _
    $region17: #{tpu_custom_call.1} parent=1 // pred_fallthru
      _
    // Predicated region
    $region18: #{tpu_custom_call.1} parent=1 // pred_check
      _
    $region19: #{tpu_custom_call.1} parent=1 // pred_check_branch
      %56 = sbr.rel (0) target = $region21
    $region20: #{tpu_custom_call.1} parent=1 // pred_region
      %s58 = ssub.s32 512, 512
      %59 = vsyncadd [#allocation9], %s58
      %s60 = sshll.u32 [#allocation8], 4
      %s61 = int_to_ptr.vmem [resolvable:$true] %s60
      %66 = dma.hbm_to_vmem [thread:$0]  %s4, 512, %s61, [#allocation9], 128, 128, 8
    $region21: #{tpu_custom_call.1} parent=1 // pred_fallthru
      _
    // Predicated region
    $region22: #{tpu_custom_call.1} parent=1 // pred_check
      _
    $region23: #{tpu_custom_call.1} parent=1 // pred_check_branch
      %68 = sbr.rel (0) target = $region25
    $region24: #{tpu_custom_call.1} parent=1 // pred_region
      _
    $region25: #{tpu_custom_call.1} parent=1 // pred_fallthru
      _
    // Predicated region
    $region26: #{tpu_custom_call.1} parent=1 // pred_check
      _
    $region27: #{tpu_custom_call.1} parent=1 // pred_check_branch
      %70 = sbr.rel (0) target = $region29
    $region28: #{tpu_custom_call.1} parent=1 // pred_region
      %s72 = ssub.s32 512, 512
      %73 = vsyncadd [#allocation9], %s72
      %s74 = sshll.u32 [#allocation10], 4
      %s75 = int_to_ptr.vmem [resolvable:$true] %s74
      %80 = dma.hbm_to_vmem [thread:$0]  %s6, 512, %s75, [#allocation9], 128, 128, 8
    $region29: #{tpu_custom_call.1} parent=1 // pred_fallthru
      _
    // Predicated region
    $region30: #{tpu_custom_call.1} parent=1 // pred_check
      _
    $region31: #{tpu_custom_call.1} parent=1 // pred_check_branch
      %82 = sbr.rel (0) target = $region33
    $region32: #{tpu_custom_call.1} parent=1 // pred_region
      _
    $region33: #{tpu_custom_call.1} parent=1 // pred_fallthru
      _
    // Predicated region
    $region34: #{tpu_custom_call.1} parent=1 // pred_check
      _
    $region35: #{tpu_custom_call.1} parent=1 // pred_check_branch
      %84 = sbr.rel (0) target = $region37
    $region36: #{tpu_custom_call.1} parent=1 // pred_region
      %85 = dma.done [#allocation3], 256
    $region37: #{tpu_custom_call.1} parent=1 // pred_fallthru
      _
    // Predicated region
    $region38: #{tpu_custom_call.1} parent=1 // pred_check
      _
    $region39: #{tpu_custom_call.1} parent=1 // pred_check_branch
      %87 = sbr.rel (0) target = $region41
    $region40: #{tpu_custom_call.1} parent=1 // pred_region
      %88 = dma.done [#allocation6], 256
    $region41: #{tpu_custom_call.1} parent=1 // pred_fallthru
      _
    // Predicated region
    $region42: #{tpu_custom_call.1} parent=1 // pred_check
      _
    $region43: #{tpu_custom_call.1} parent=1 // pred_check_branch
      %90 = sbr.rel (0) target = $region45
    $region44: #{tpu_custom_call.1} parent=1 // pred_region
      %91 = dma.done [#allocation6], 512
    $region45: #{tpu_custom_call.1} parent=1 // pred_fallthru
      _
    // Predicated region
    $region46: #{tpu_custom_call.1} parent=1 // pred_check
      _
    $region47: #{tpu_custom_call.1} parent=1 // pred_check_branch
      %93 = sbr.rel (0) target = $region49
    $region48: #{tpu_custom_call.1} parent=1 // pred_region
      %94 = dma.done [#allocation9], 512
    $region49: #{tpu_custom_call.1} parent=1 // pred_fallthru
      _
    // Predicated region
    $region50: #{tpu_custom_call.1} parent=1 // pred_check
      _
    $region51: #{tpu_custom_call.1} parent=1 // pred_check_branch
      %96 = sbr.rel (0) target = $region53
    $region52: #{tpu_custom_call.1} parent=1 // pred_region
      %97 = dma.done [#allocation9], 512
    $region53: #{tpu_custom_call.1} parent=1 // pred_fallthru
      _
    %v98 = vld [vmem:[#allocation2] sm:$0xff]
    %v99 = vld [vmem:[#allocation2 + $0x8] sm:$0xff]
    %v100 = vld [vmem:[#allocation7] sm:$0xff]
    %v101 = vld [vmem:[#allocation7 + $0x8] sm:$0xff]
    %v102 = vld [vmem:[#allocation7 + $0x10] sm:$0xff]
    %v103 = vld [vmem:[#allocation7 + $0x18] sm:$0xff]
    %v104 = vld [vmem:[%s3] sm:$0x1]
    %v106 = vlaneseq
    %v107 = vshrl.u32 %v106, 7
    %v108 = vsub.s32 0, %v107
    %v109 = vrot.slane %v104, %v108
    %vm111 = vcmask 261120
    %v113 = vsel %vm111, %v98, 0
    %v116 = vsel %vm111, %v99, 0
    %118 = vmatprep.subr.mxu0 0.0
    %119 = vmatpush1.msra.mxu0 0.0
    %120 = vmatprep.subr.mxu0 0.0
    %121 = vmatpush1.msra.mxu0 0.0
    %122 = vmatprep.subr.mxu0 0.0
    %123 = vmatpush1.msra.mxu0 0.0
    %124 = vmatprep.subr.mxu0 0.0
    %125 = vmatpush1.msra.mxu0 0.0
    %126 = vmatprep.subr.mxu0 0.0
    %127 = vmatpush1.msra.mxu0 0.0
    %128 = vmatprep.subr.mxu0 0.0
    %129 = vmatpush1.msra.mxu0 0.0
    %130 = vmatprep.subr.mxu0 0.0
    %131 = vmatpush1.msra.mxu0 0.0
    %132 = vmatprep.subr.mxu0 0.0
    %133 = vmatpush1.msra.mxu0 0.0
    %134 = vmatprep.subr.mxu0 0.0
    %135 = vmatpush1.msra.mxu0 0.0
    %136 = vmatprep.subr.mxu0 0.0
    %137 = vmatpush1.msra.mxu0 0.0
    %138 = vmatprep.subr.mxu0 0.0
    %139 = vmatpush1.msra.mxu0 0.0
    %140 = vmatprep.subr.mxu0 0.0
    %141 = vmatpush1.msra.mxu0 0.0
    %142 = vmatprep.subr.mxu0 0.0
    %143 = vmatpush1.msra.mxu0 %v103
    %144 = vmatprep.subr.mxu0 0.0
    %145 = vmatpush1.msra.mxu0 %v102
    %146 = vmatprep.subr.mxu0 0.0
    %147 = vmatpush1.msra.mxu0 %v101
    %148 = vmatprep.subr.mxu0 0.0
    %149 = vmatpush1.msra.mxu0 %v100
    %150 = vmatprep.subr.mxu0 0.0
    %151 = vmatpush2.msra.mxu0 0.0
    %152 = vmatprep.subr.mxu0 0.0
    %153 = vmatpush2.msra.mxu0 0.0
    %154 = vmatprep.subr.mxu0 0.0
    %155 = vmatpush2.msra.mxu0 0.0
    %156 = vmatprep.subr.mxu0 0.0
    %157 = vmatpush2.msra.mxu0 0.0
    %158 = vmatprep.subr.mxu0 0.0
    %159 = vmatpush2.msra.mxu0 0.0
    %160 = vmatprep.subr.mxu0 0.0
    %161 = vmatpush2.msra.mxu0 0.0
    %162 = vmatprep.subr.mxu0 0.0
    %163 = vmatpush2.msra.mxu0 0.0
    %164 = vmatprep.subr.mxu0 0.0
    %165 = vmatpush2.msra.mxu0 0.0
    %166 = vmatprep.subr.mxu0 0.0
    %167 = vmatpush2.msra.mxu0 0.0
    %168 = vmatprep.subr.mxu0 0.0
    %169 = vmatpush2.msra.mxu0 0.0
    %170 = vmatprep.subr.mxu0 0.0
    %171 = vmatpush2.msra.mxu0 0.0
    %172 = vmatprep.subr.mxu0 0.0
    %173 = vmatpush2.msra.mxu0 0.0
    %174 = vmatprep.subr.mxu0 0.0
    %175 = vmatpush2.msra.mxu0 0.0
    %176 = vmatprep.subr.mxu0 0.0
    %177 = vmatpush2.msra.mxu0 0.0
    %178 = vmatprep.subr.mxu0 0.0
    %179 = vmatpush2.msra.mxu0 0.0
    %180 = vmatprep.subr.mxu0 0.0
    %181 = vmatpush2.msra.mxu0 0.0
    %182 = vmatprep.mubr.f32.mxu0 0.0
    %183 = vmatmul.mubr.f32.gmra.mxu0 %v113
    %v184 = vpop.f32.mrf.mxu0
    %v185 = vadd.f32 %v109, %v184
    %v186 = vpop.f32.mrf.mxu0
    %187 = vmatprep.mubr.f32.mxu0 0.0
    %188 = vmatmul.mubr.f32.gmra.mxu0 %v116
    %v189 = vpop.f32.mrf.mxu0
    %v190 = vadd.f32 %v109, %v189
    %v191 = vpop.f32.mrf.mxu0
    %192 = vdwg.mxu0
    %v193 = vsub.f32 0.0, %v185
    %v194 = vsub.f32 0.0, %v190
    %v195 = vmul.f32 %v193, 1.442695
    %v196 = vpow.pop %v195
    %v197 = vmul.f32 %v194, 1.442695
    %v198 = vpow.pop %v197
    %v199 = vadd.f32 %v196, 1.0
    %v200 = vadd.f32 %v198, 1.0
    %v201 = vrcp.pop %v199
    %v202 = vmul.f32 1.0, %v201
    %v203 = vrcp.pop %v200
    %v204 = vmul.f32 1.0, %v203
    %v205 = vmul.f32 %v185, %v202
    %v206 = vmul.f32 %v190, %v204
    %v207 = vld [vmem:[#allocation8] sm:$0xff]
    %v208 = vld [vmem:[#allocation8 + $0x8] sm:$0xff]
    %v209 = vld [vmem:[#allocation8 + $0x10] sm:$0xff]
    %v210 = vld [vmem:[#allocation8 + $0x18] sm:$0xff]
    %v211 = vld [vmem:[%s5] sm:$0x1]
    %v213 = vlaneseq
    %v214 = vshrl.u32 %v213, 7
    %v215 = vsub.s32 0, %v214
    %v216 = vrot.slane %v211, %v215
    %v219 = vsel %vm111, %v205, 0
    %v222 = vsel %vm111, %v206, 0
    %224 = vmatprep.subr.mxu0 0.0
    %225 = vmatpush1.msra.mxu0 0.0
    %226 = vmatprep.subr.mxu0 0.0
    %227 = vmatpush1.msra.mxu0 0.0
    %228 = vmatprep.subr.mxu0 0.0
    %229 = vmatpush1.msra.mxu0 0.0
    %230 = vmatprep.subr.mxu0 0.0
    %231 = vmatpush1.msra.mxu0 0.0
    %232 = vmatprep.subr.mxu0 0.0
    %233 = vmatpush1.msra.mxu0 0.0
    %234 = vmatprep.subr.mxu0 0.0
    %235 = vmatpush1.msra.mxu0 0.0
    %236 = vmatprep.subr.mxu0 0.0
    %237 = vmatpush1.msra.mxu0 0.0
    %238 = vmatprep.subr.mxu0 0.0
    %239 = vmatpush1.msra.mxu0 0.0
    %240 = vmatprep.subr.mxu0 0.0
    %241 = vmatpush1.msra.mxu0 0.0
    %242 = vmatprep.subr.mxu0 0.0
    %243 = vmatpush1.msra.mxu0 0.0
    %244 = vmatprep.subr.mxu0 0.0
    %245 = vmatpush1.msra.mxu0 0.0
    %246 = vmatprep.subr.mxu0 0.0
    %247 = vmatpush1.msra.mxu0 0.0
    %248 = vmatprep.subr.mxu0 0.0
    %249 = vmatpush1.msra.mxu0 %v210
    %250 = vmatprep.subr.mxu0 0.0
    %251 = vmatpush1.msra.mxu0 %v209
    %252 = vmatprep.subr.mxu0 0.0
    %253 = vmatpush1.msra.mxu0 %v208
    %254 = vmatprep.subr.mxu0 0.0
    %255 = vmatpush1.msra.mxu0 %v207
    %256 = vmatprep.subr.mxu0 0.0
    %257 = vmatpush2.msra.mxu0 0.0
    %258 = vmatprep.subr.mxu0 0.0
    %259 = vmatpush2.msra.mxu0 0.0
    %260 = vmatprep.subr.mxu0 0.0
    %261 = vmatpush2.msra.mxu0 0.0
    %262 = vmatprep.subr.mxu0 0.0
    %263 = vmatpush2.msra.mxu0 0.0
    %264 = vmatprep.subr.mxu0 0.0
    %265 = vmatpush2.msra.mxu0 0.0
    %266 = vmatprep.subr.mxu0 0.0
    %267 = vmatpush2.msra.mxu0 0.0
    %268 = vmatprep.subr.mxu0 0.0
    %269 = vmatpush2.msra.mxu0 0.0
    %270 = vmatprep.subr.mxu0 0.0
    %271 = vmatpush2.msra.mxu0 0.0
    %272 = vmatprep.subr.mxu0 0.0
    %273 = vmatpush2.msra.mxu0 0.0
    %274 = vmatprep.subr.mxu0 0.0
    %275 = vmatpush2.msra.mxu0 0.0
    %276 = vmatprep.subr.mxu0 0.0
    %277 = vmatpush2.msra.mxu0 0.0
    %278 = vmatprep.subr.mxu0 0.0
    %279 = vmatpush2.msra.mxu0 0.0
    %280 = vmatprep.subr.mxu0 0.0
    %281 = vmatpush2.msra.mxu0 0.0
    %282 = vmatprep.subr.mxu0 0.0
    %283 = vmatpush2.msra.mxu0 0.0
    %284 = vmatprep.subr.mxu0 0.0
    %285 = vmatpush2.msra.mxu0 0.0
    %286 = vmatprep.subr.mxu0 0.0
    %287 = vmatpush2.msra.mxu0 0.0
    %288 = vmatprep.mubr.f32.mxu0 0.0
    %289 = vmatmul.mubr.f32.gmra.mxu0 %v219
    %v290 = vpop.f32.mrf.mxu0
    %v291 = vadd.f32 %v216, %v290
    %v292 = vpop.f32.mrf.mxu0
    %293 = vmatprep.mubr.f32.mxu0 0.0
    %294 = vmatmul.mubr.f32.gmra.mxu0 %v222
    %v295 = vpop.f32.mrf.mxu0
    %v296 = vadd.f32 %v216, %v295
    %v297 = vpop.f32.mrf.mxu0
    %298 = vdwg.mxu0
    %v299 = vld [vmem:[#allocation10] sm:$0xff]
    %v300 = vld [vmem:[#allocation10 + $0x8] sm:$0xff]
    %v301 = vld [vmem:[#allocation10 + $0x10] sm:$0xff]
    %v302 = vld [vmem:[#allocation10 + $0x18] sm:$0xff]
    %v303 = vld [vmem:[%s7] sm:$0x1]
    %v305 = vlaneseq
    %v306 = vshrl.u32 %v305, 7
    %v307 = vsub.s32 0, %v306
    %v308 = vrot.slane %v303, %v307
    %310 = vmatprep.subr.mxu0 0.0
    %311 = vmatpush1.msra.mxu0 0.0
    %312 = vmatprep.subr.mxu0 0.0
    %313 = vmatpush1.msra.mxu0 0.0
    %314 = vmatprep.subr.mxu0 0.0
    %315 = vmatpush1.msra.mxu0 0.0
    %316 = vmatprep.subr.mxu0 0.0
    %317 = vmatpush1.msra.mxu0 0.0
    %318 = vmatprep.subr.mxu0 0.0
    %319 = vmatpush1.msra.mxu0 0.0
    %320 = vmatprep.subr.mxu0 0.0
    %321 = vmatpush1.msra.mxu0 0.0
    %322 = vmatprep.subr.mxu0 0.0
    %323 = vmatpush1.msra.mxu0 0.0
    %324 = vmatprep.subr.mxu0 0.0
    %325 = vmatpush1.msra.mxu0 0.0
    %326 = vmatprep.subr.mxu0 0.0
    %327 = vmatpush1.msra.mxu0 0.0
    %328 = vmatprep.subr.mxu0 0.0
    %329 = vmatpush1.msra.mxu0 0.0
    %330 = vmatprep.subr.mxu0 0.0
    %331 = vmatpush1.msra.mxu0 0.0
    %332 = vmatprep.subr.mxu0 0.0
    %333 = vmatpush1.msra.mxu0 0.0
    %334 = vmatprep.subr.mxu0 0.0
    %335 = vmatpush1.msra.mxu0 %v302
    %336 = vmatprep.subr.mxu0 0.0
    %337 = vmatpush1.msra.mxu0 %v301
    %338 = vmatprep.subr.mxu0 0.0
    %339 = vmatpush1.msra.mxu0 %v300
    %340 = vmatprep.subr.mxu0 0.0
    %341 = vmatpush1.msra.mxu0 %v299
    %342 = vmatprep.subr.mxu0 0.0
    %343 = vmatpush2.msra.mxu0 0.0
    %344 = vmatprep.subr.mxu0 0.0
    %345 = vmatpush2.msra.mxu0 0.0
    %346 = vmatprep.subr.mxu0 0.0
    %347 = vmatpush2.msra.mxu0 0.0
    %348 = vmatprep.subr.mxu0 0.0
    %349 = vmatpush2.msra.mxu0 0.0
    %350 = vmatprep.subr.mxu0 0.0
    %351 = vmatpush2.msra.mxu0 0.0
    %352 = vmatprep.subr.mxu0 0.0
    %353 = vmatpush2.msra.mxu0 0.0
    %354 = vmatprep.subr.mxu0 0.0
    %355 = vmatpush2.msra.mxu0 0.0
    %356 = vmatprep.subr.mxu0 0.0
    %357 = vmatpush2.msra.mxu0 0.0
    %358 = vmatprep.subr.mxu0 0.0
    %359 = vmatpush2.msra.mxu0 0.0
    %360 = vmatprep.subr.mxu0 0.0
    %361 = vmatpush2.msra.mxu0 0.0
    %362 = vmatprep.subr.mxu0 0.0
    %363 = vmatpush2.msra.mxu0 0.0
    %364 = vmatprep.subr.mxu0 0.0
    %365 = vmatpush2.msra.mxu0 0.0
    %366 = vmatprep.subr.mxu0 0.0
    %367 = vmatpush2.msra.mxu0 0.0
    %368 = vmatprep.subr.mxu0 0.0
    %369 = vmatpush2.msra.mxu0 0.0
    %370 = vmatprep.subr.mxu0 0.0
    %371 = vmatpush2.msra.mxu0 0.0
    %372 = vmatprep.subr.mxu0 0.0
    %373 = vmatpush2.msra.mxu0 0.0
    %374 = vmatprep.mubr.f32.mxu0 0.0
    %375 = vmatmul.mubr.f32.gmra.mxu0 %v219
    %v376 = vpop.f32.mrf.mxu0
    %v377 = vadd.f32 %v308, %v376
    %v378 = vpop.f32.mrf.mxu0
    %379 = vmatprep.mubr.f32.mxu0 0.0
    %380 = vmatmul.mubr.f32.gmra.mxu0 %v222
    %v381 = vpop.f32.mrf.mxu0
    %v382 = vadd.f32 %v308, %v381
    %v383 = vpop.f32.mrf.mxu0
    %384 = vdwg.mxu0
    %v385 = vld [vmem:[#allocation5] sm:$0xff]
    %v386 = vld [vmem:[#allocation5 + $0x8] sm:$0xff]
    %v387 = vmul.f32 %v291, %v385
    %v388 = vmul.f32 %v296, %v386
    %v389 = vadd.f32 %v387, %v377
    %v390 = vadd.f32 %v388, %v382
    %391 = vst.msk [vmem:[#allocation11] sm:$0xff] %vm111, %v389
    %392 = vst.msk [vmem:[#allocation11 + $0x8] sm:$0xff] %vm111, %v390
    // Predicated region
    $region54: #{tpu_custom_call.1} parent=1 // pred_check
      _
    $region55: #{tpu_custom_call.1} parent=1 // pred_check_branch
      %394 = sbr.rel (0) target = $region57
    $region56: #{tpu_custom_call.1} parent=1 // pred_region
      %s396 = ssub.s32 256, 256
      %397 = vsyncadd [#allocation4], %s396
      %s398 = sshll.u32 [#allocation11], 4
      %s399 = int_to_ptr.vmem [resolvable:$true] %s398
      %404 = dma.vmem_to_hbm [thread:$0]  %s399, 256, %s8, [#allocation4], 128, 128, 8
    $region57: #{tpu_custom_call.1} parent=1 // pred_fallthru
      _
    // Predicated region
    $region58: #{tpu_custom_call.1} parent=1 // pred_check
      _
    $region59: #{tpu_custom_call.1} parent=1 // pred_check_branch
      %406 = sbr.rel (0) target = $region61
    $region60: #{tpu_custom_call.1} parent=1 // pred_region
      %407 = dma.done [#allocation4], 256
    $region61: #{tpu_custom_call.1} parent=1 // pred_fallthru
      _
    %408 = vsyncpa [#allocation3], 1
    %409 = vsyncpa [#allocation6], 1
    %410 = vsyncpa [#allocation9], 1
    %411 = vsyncpa [#allocation4], 1

</llo_original>
